<compile_context>
chip_gen: v7x
topology: tpu7x:2x2x1
jax: 0.10.0
libtpu: 0.0.40
codegen_flags: <defaults>
</compile_context>

<pallas_src>
import math

import jax
import jax.numpy as jnp
from jax.experimental import pallas as pl
from jax.experimental.pallas import tpu as pltpu


def fcn_kernel(xT_ref, w1_ref, b1_ref, w2_ref, b2_ref, w3_ref, b3_ref, y_ref):
    # xT_ref: (n_in, tm) bf16   -- batch on the lane axis
    # w1_ref: (h0, n_in) bf16   w2_ref: (h1, h0) bf16   (PyTorch orientation)
    # b1_ref: (h0, 1) f32       b2_ref: (h1, 1) f32
    # w3_ref: (h1, 1) f32       b3_ref: (1, 1) f32 in SMEM
    xT = xT_ref[...]

    # layer 1 (MXU, bf16 in / f32 acc) + bias + ReLU  (dropout = identity)
    h1 = jnp.dot(w1_ref[...], xT, preferred_element_type=jnp.float32)
    h1 = jnp.maximum(h1 + b1_ref[...], 0.0)                       # (h0, tm) f32

    # layer 2 -> emb, then ReLU
    emb = jnp.dot(w2_ref[...], h1.astype(jnp.bfloat16),
                  preferred_element_type=jnp.float32) + b2_ref[...]
    h2 = jnp.maximum(emb, 0.0)                                    # (h1, tm) f32

    # layer 3 (out_features = 1): VPU mul + sublane reduce, not an MXU matmul.
    logit = jnp.sum(h2 * w3_ref[...], axis=0, keepdims=True) + b3_ref[0, 0]
    y_ref[...] = jax.nn.sigmoid(logit).astype(y_ref.dtype)        # (1, tm)


def fcn_forward(x, params, *, tm=256):
    """x: (B, n_input) f32. Returns (B, 1) f32 probabilities."""
    B, n_in = x.shape
    w1 = params["w1"].astype(jnp.bfloat16)     # (h0, n_in)
    w2 = params["w2"].astype(jnp.bfloat16)     # (h1, h0)
    b1 = params["b1"]                          # (h0, 1) f32
    b2 = params["b2"]                          # (h1, 1) f32
    w3 = params["w3"]                          # (h1, 1) f32
    b3 = params["b3"]                          # (1, 1)  f32
    h0, h1d = w1.shape[0], w2.shape[0]

    n_tiles = pl.cdiv(B, tm)
    b_pad = n_tiles * tm
    if b_pad != B:
        x = jnp.pad(x, ((0, b_pad - B), (0, 0)))
    xT = x.astype(jnp.bfloat16).T              # (n_in, b_pad), batch -> lanes

    yT = pl.pallas_call(
        fcn_kernel,
        out_shape=jax.ShapeDtypeStruct((1, b_pad), jnp.float32),
        grid_spec=pltpu.PrefetchScalarGridSpec(
            num_scalar_prefetch=0,
            grid=(n_tiles,),
            in_specs=[
                pl.BlockSpec((n_in, tm), lambda i: (0, i)),    # x^T tile
                pl.BlockSpec((h0, n_in), lambda i: (0, 0)),    # W1
                pl.BlockSpec((h0, 1),    lambda i: (0, 0)),    # b1
                pl.BlockSpec((h1d, h0),  lambda i: (0, 0)),    # W2
                pl.BlockSpec((h1d, 1),   lambda i: (0, 0)),    # b2
                pl.BlockSpec((h1d, 1),   lambda i: (0, 0)),    # w3 (column)
                pl.BlockSpec(memory_space=pltpu.MemorySpace.SMEM),  # b3 scalar
            ],
            out_specs=pl.BlockSpec((1, tm), lambda i: (0, i)), # lane-dense slab
        ),
        compiler_params=pltpu.CompilerParams(
            dimension_semantics=("parallel",)),
    )(xT, w1, b1, w2, b2, w3, b3)

    return yT[0, :B].reshape(B, 1)


def init_params(key, n_input, n_hidden):
    """Deterministic PyTorch-style init; weights stored (out, in), biases (out, 1)."""
    def linear(key, fan_in, fan_out):
        kw, kb = jax.random.split(key)
        bound = 1.0 / math.sqrt(fan_in)
        w = jax.random.uniform(kw, (fan_out, fan_in), jnp.float32, -bound, bound)
        b = jax.random.uniform(kb, (fan_out, 1), jnp.float32, -bound, bound)
        return w, b

    k1, k2, k3 = jax.random.split(key, 3)
    w1, b1 = linear(k1, n_input, n_hidden[0])
    w2, b2 = linear(k2, n_hidden[0], n_hidden[1])
    w3, b3 = linear(k3, n_hidden[1], 1)        # w3: (1, h1)
    return {"w1": w1, "b1": b1, "w2": w2, "b2": b2,
            "w3": w3.T, "b3": b3}              # store w3 as (h1, 1) column


def fcn_reference(x, p):
    """Reference mirroring the kernel's bf16-matmul / f32-accumulate numerics."""
    xb = x.astype(jnp.bfloat16)
    w1b = p["w1"].astype(jnp.bfloat16)
    w2b = p["w2"].astype(jnp.bfloat16)
    h1 = jnp.maximum(
        jnp.dot(xb, w1b.T, preferred_element_type=jnp.float32) + p["b1"].T, 0.0)
    emb = jnp.dot(h1.astype(jnp.bfloat16), w2b.T,
                  preferred_element_type=jnp.float32) + p["b2"].T
    h2 = jnp.maximum(emb, 0.0)
    return jax.nn.sigmoid(h2 @ p["w3"] + p["b3"])


if __name__ == "__main__":
    key = jax.random.PRNGKey(0)
    k_x, k_p = jax.random.split(key)

    B, n_input = 500, 32          # non-multiple of the tile -> exercises padding
    n_hidden = (64, 32)

    x = jax.random.normal(k_x, (B, n_input), jnp.float32)
    params = init_params(k_p, n_input, n_hidden)

    y = jax.block_until_ready(fcn_forward(x, params, tm=256))  # grid = 2 steps

    y_ref = fcn_reference(x, params)
    assert y.shape == (B, 1)
    assert jnp.allclose(y, y_ref, atol=1e-3, rtol=1e-3), \
        float(jnp.max(jnp.abs(y - y_ref)))

    print("KERNEL_OK")
</pallas_src>

<mosaic_0001>
module attributes {stable_mosaic.version = 11 : i64} {
  func.func @fcn_kernel(%arg0: i32, %arg1: memref<32x256xbf16, #tpu.memory_space<vmem>>, %arg2: memref<64x32xbf16, #tpu.memory_space<vmem>>, %arg3: memref<64x1xf32, #tpu.memory_space<vmem>>, %arg4: memref<32x64xbf16, #tpu.memory_space<vmem>>, %arg5: memref<32x1xf32, #tpu.memory_space<vmem>>, %arg6: memref<32x1xf32, #tpu.memory_space<vmem>>, %arg7: memref<1x1xf32, #tpu.memory_space<smem>>, %arg8: memref<1x256xf32, #tpu.memory_space<vmem>>) attributes {dimension_semantics = [#tpu.dimension_semantics<parallel>], iteration_bounds = array<i64: 2>, scalar_prefetch = 0 : i64, scratch_operands = 0 : i64, tpu.core_type = #tpu.core_type<tc>, window_params = [{transform_indices = @transform_0, window_bounds = array<i64: 32, 256>}, {pipeline_mode = #tpu.pipeline_mode<synchronous>, transform_indices = @transform_1, window_bounds = array<i64: 64, 32>}, {pipeline_mode = #tpu.pipeline_mode<synchronous>, transform_indices = @transform_2, window_bounds = array<i64: 64, 1>}, {pipeline_mode = #tpu.pipeline_mode<synchronous>, transform_indices = @transform_3, window_bounds = array<i64: 32, 64>}, {pipeline_mode = #tpu.pipeline_mode<synchronous>, transform_indices = @transform_4, window_bounds = array<i64: 32, 1>}, {pipeline_mode = #tpu.pipeline_mode<synchronous>, transform_indices = @transform_5, window_bounds = array<i64: 32, 1>}, {transform_indices = @transform_6, window_bounds = array<i64: 1, 1>}, {transform_indices = @transform_7, window_bounds = array<i64: 1, 256>}]} {
    %c0 = arith.constant 0 : index
    %c0_0 = arith.constant 0 : index
    %0 = vector.load %arg1[%c0, %c0_0] : memref<32x256xbf16, #tpu.memory_space<vmem>>, vector<32x256xbf16>
    %c0_1 = arith.constant 0 : index
    %c0_2 = arith.constant 0 : index
    %1 = vector.load %arg2[%c0_1, %c0_2] : memref<64x32xbf16, #tpu.memory_space<vmem>>, vector<64x32xbf16>
    %cst = arith.constant dense<0.000000e+00> : vector<64x256xf32>
    %2 = tpu.matmul %1, %0, %cst {dimension_numbers = #tpu.dot_dimension_numbers<[1], [0], [0], [1], [0, 0, 1, 1], [], []>} : vector<64x32xbf16>, vector<32x256xbf16>, vector<64x256xf32> -> vector<64x256xf32>
    %c0_3 = arith.constant 0 : index
    %c0_4 = arith.constant 0 : index
    %3 = vector.load %arg3[%c0_3, %c0_4] : memref<64x1xf32, #tpu.memory_space<vmem>>, vector<64x1xf32>
    %4 = vector.broadcast %3 : vector<64x1xf32> to vector<64x256xf32>
    %5 = arith.addf %2, %4 : vector<64x256xf32>
    %cst_5 = arith.constant 0.000000e+00 : f32
    %6 = vector.broadcast %cst_5 : f32 to vector<64x256xf32>
    %7 = arith.maximumf %5, %6 : vector<64x256xf32>
    %c0_6 = arith.constant 0 : index
    %c0_7 = arith.constant 0 : index
    %8 = vector.load %arg4[%c0_6, %c0_7] : memref<32x64xbf16, #tpu.memory_space<vmem>>, vector<32x64xbf16>
    %9 = arith.truncf %7 : vector<64x256xf32> to vector<64x256xbf16>
    %cst_8 = arith.constant dense<0.000000e+00> : vector<32x256xf32>
    %10 = tpu.matmul %8, %9, %cst_8 {dimension_numbers = #tpu.dot_dimension_numbers<[1], [0], [0], [1], [0, 0, 1, 1], [], []>} : vector<32x64xbf16>, vector<64x256xbf16>, vector<32x256xf32> -> vector<32x256xf32>
    %c0_9 = arith.constant 0 : index
    %c0_10 = arith.constant 0 : index
    %11 = vector.load %arg5[%c0_9, %c0_10] : memref<32x1xf32, #tpu.memory_space<vmem>>, vector<32x1xf32>
    %12 = vector.broadcast %11 : vector<32x1xf32> to vector<32x256xf32>
    %13 = arith.addf %10, %12 : vector<32x256xf32>
    %cst_11 = arith.constant 0.000000e+00 : f32
    %14 = vector.broadcast %cst_11 : f32 to vector<32x256xf32>
    %15 = arith.maximumf %13, %14 : vector<32x256xf32>
    %c0_12 = arith.constant 0 : index
    %c0_13 = arith.constant 0 : index
    %16 = vector.load %arg6[%c0_12, %c0_13] : memref<32x1xf32, #tpu.memory_space<vmem>>, vector<32x1xf32>
    %17 = vector.broadcast %16 : vector<32x1xf32> to vector<32x256xf32>
    %18 = arith.mulf %15, %17 : vector<32x256xf32>
    %cst_14 = arith.constant dense<0.000000e+00> : vector<256xf32>
    %19 = vector.multi_reduction <add>, %18, %cst_14 [0] : vector<32x256xf32> to vector<256xf32>
    %20 = vector.shape_cast %19 : vector<256xf32> to vector<1x256xf32>
    %c0_15 = arith.constant 0 : index
    %c0_16 = arith.constant 0 : index
    %21 = memref.load %arg7[%c0_15, %c0_16] : memref<1x1xf32, #tpu.memory_space<smem>>
    %22 = vector.broadcast %21 : f32 to vector<1x256xf32>
    %23 = arith.addf %20, %22 : vector<1x256xf32>
    %24 = arith.negf %23 : vector<1x256xf32>
    %25 = math.exp %24 : vector<1x256xf32>
    %cst_17 = arith.constant 1.000000e+00 : f32
    %26 = vector.broadcast %cst_17 : f32 to vector<1x256xf32>
    %27 = arith.addf %26, %25 : vector<1x256xf32>
    %28 = arith.divf %26, %27 : vector<1x256xf32>
    %c0_18 = arith.constant 0 : index
    %c0_19 = arith.constant 0 : index
    %29 = vector.load %arg8[%c0_18, %c0_19] : memref<1x256xf32, #tpu.memory_space<vmem>>, vector<1x256xf32>
    tpu.vector_store %arg8[%c0_18, %c0_19], %28 {strides = array<i32>} : memref<1x256xf32, #tpu.memory_space<vmem>>, vector<1x256xf32>,
    return
  }
  func.func @transform_0(%arg0: i32) -> (i32, i32) {
    %c0_i32 = arith.constant 0 : i32
    %c0_i32_0 = arith.constant 0 : i32
    return %c0_i32, %arg0 : i32, i32
  }
  func.func @transform_1(%arg0: i32) -> (i32, i32) {
    %c0_i32 = arith.constant 0 : i32
    %c0_i32_0 = arith.constant 0 : i32
    %c0_i32_1 = arith.constant 0 : i32
    return %c0_i32, %c0_i32_0 : i32, i32
  }
  func.func @transform_2(%arg0: i32) -> (i32, i32) {
    %c0_i32 = arith.constant 0 : i32
    %c0_i32_0 = arith.constant 0 : i32
    %c0_i32_1 = arith.constant 0 : i32
    return %c0_i32, %c0_i32_0 : i32, i32
  }
  func.func @transform_3(%arg0: i32) -> (i32, i32) {
    %c0_i32 = arith.constant 0 : i32
    %c0_i32_0 = arith.constant 0 : i32
    %c0_i32_1 = arith.constant 0 : i32
    return %c0_i32, %c0_i32_0 : i32, i32
  }
  func.func @transform_4(%arg0: i32) -> (i32, i32) {
    %c0_i32 = arith.constant 0 : i32
    %c0_i32_0 = arith.constant 0 : i32
    %c0_i32_1 = arith.constant 0 : i32
    return %c0_i32, %c0_i32_0 : i32, i32
  }
  func.func @transform_5(%arg0: i32) -> (i32, i32) {
    %c0_i32 = arith.constant 0 : i32
    %c0_i32_0 = arith.constant 0 : i32
    %c0_i32_1 = arith.constant 0 : i32
    return %c0_i32, %c0_i32_0 : i32, i32
  }
  func.func @transform_6(%arg0: i32) -> (i32, i32) {
    %c0_i32 = arith.constant 0 : i32
    %c0_i32_0 = arith.constant 0 : i32
    %c0_i32_1 = arith.constant 0 : i32
    return %c0_i32, %c0_i32_0 : i32, i32
  }
  func.func @transform_7(%arg0: i32) -> (i32, i32) {
    %c0_i32 = arith.constant 0 : i32
    %c0_i32_0 = arith.constant 0 : i32
    return %c0_i32, %arg0 : i32, i32
  }
}

</mosaic_0001>

<llo_original>
// kernel: tpu_custom_call.1
$region0: #{tpu_custom_call.1}
  #allocation0 [shape = 'u32[]', space=smem, size = 0x4, offset = 0x4, fixed_abs, tag = 'smem constant byte address 0x4 - core index']
  #allocation1 [shape = 'u32[144,128]{1,0:T(1,128)}', space=vmem, size = 0x12000, scoped, tag = 'internal scratch']
  #allocation2 [shape = 'f32[1,1]{1,0:T(1,128)S(6)}', space=smem, size = 0x200, scoped, tag = 'scoped memory for tpu_custom_call.1']
  %s0 = inlined_call_operand.vmem [shape: bf16[32,512], index: 0, kind: input, shape index: {}]
  %s1 = inlined_call_operand.vmem [shape: bf16[64,32], index: 1, kind: input, shape index: {}]
  %s2 = inlined_call_operand.vmem [shape: f32[64,1], index: 2, kind: input, shape index: {}]
  %s3 = inlined_call_operand.vmem [shape: bf16[32,64], index: 3, kind: input, shape index: {}]
  %s4 = inlined_call_operand.vmem [shape: f32[32,1], index: 4, kind: input, shape index: {}]
  %s5 = inlined_call_operand.vmem [shape: f32[32,1], index: 5, kind: input, shape index: {}]
  %s6 = inlined_call_operand.<no memory space> [shape: f32[1,1], index: 6, kind: input, shape index: {}]
  %s7 = inlined_call_operand.hbm [shape: f32[1,512], index: 7, kind: output, shape index: {}]
  %s8 = sld [smem:[#allocation0]]
  $region99: #{tpu_custom_call.1} parent=0
    _
  %s10 = ssub.s32 1, %s8
  %s11 = scalar_select 0, %s10, %s8
  %12 = sst [smem:[#allocation2]] %s6
  $region1: #{tpu_custom_call.1} parent=0
    #allocation3 [shape = 'u8[32768]{0}', space=vmem, size = 0x8000, scoped, tag = 'input window, operand 0']
    #allocation4 [shape = 'u8[2048]{0}', space=vmem, size = 0x800, scoped, tag = 'output window, operand 0']
    #allocation5 [shape = 's32[2]{0}', space=sflag, size = 0x8, scoped, tag = 'scoped memory for tpu_custom_call.1']
    %13 = vsyncpa [#allocation5], 0
    %s14 = scalar_lea.sflag [#allocation5], 1
    %15 = vsyncpa %s14, 0
    loop: start=0, step=1, limit=4
    $region2: #{tpu_custom_call.1} parent=1 // loop_pre_header
      _
    $region3: #{tpu_custom_call.1} parent=1 // loop_header
      %s17 = sphi 0, %s21
      %p18 = scmp.ge.s32.totalorder %s17, 4
      %s27 = sphi 0, %s29
      %s30 = sphi 0, %s27
      %s31 = sphi 0, %s30
      %s47 = sphi 0, %s31
      %s51 = sphi 0, %s51
      %s53 = sphi 0, %s51
      %s54 = sphi 0, %s53
      %s68 = sphi 0, %s54
      %s72 = sphi 0, %s72
      %s74 = sphi 0, %s72
      %s75 = sphi 0, %s74
      %s89 = sphi 0, %s75
      %s93 = sphi 0, %s93
      %s95 = sphi 0, %s93
      %s96 = sphi 0, %s95
      %s110 = sphi 0, %s96
      %s114 = sphi 0, %s114
      %s116 = sphi 0, %s114
      %s117 = sphi 0, %s116
      %s131 = sphi 0, %s117
      %s135 = sphi 0, %s135
      %s137 = sphi 0, %s135
      %s138 = sphi 0, %s137
      %s152 = sphi 0, %s138
      %s156 = sphi 0, %s156
      %s158 = sphi 0, %s156
      %s159 = sphi 0, %s158
      %s173 = sphi 0, %s159
      %s179 = sphi 0, %s181
      %s182 = sphi 0, %s179
      %s183 = sphi 0, %s182
      %s199 = sphi 0, %s183
    $region4: #{tpu_custom_call.1} parent=1 // loop_header_branch
      %20 = sbr.rel (%p18) target = $region8
    $region5: #{tpu_custom_call.1} parent=1 // loop_body
      %s22 = ssub.s32 %s17, 1
      %s23 = ssub.s32 %s17, 2
      %s24 = sadd.s32 %s17, 1
      %s25 = ssub.s32 %s17, %s24
      %p26 = scmp.eq.s32.totalorder %s25, 0
      %s28 = sadd.s32 %s27, 1
      %s29 = scalar_select %p26, %s27, %s28
      %p32 = pneg %p26
      %p33 = scmp.eq.s32.totalorder %s17, 1
      %p34 = por %p32, %p33
      %p35 = scmp.ne.s32.totalorder %s27, %s30
      %p36 = scmp.eq.s32.totalorder %s17, 0
      %p37 = por %p35, %p36
      %p38 = scmp.ne.s32.totalorder %s27, %s30
      %p39 = scmp.eq.s32.totalorder %s22, 1
      %p40 = por %p38, %p39
      %p41 = scmp.ne.s32.totalorder %s30, %s31
      %p42 = scmp.eq.s32.totalorder %s22, 0
      %p43 = por %p41, %p42
      %p44 = scmp.ne.s32.totalorder %s30, %s31
      %p45 = scmp.eq.s32.totalorder %s23, 1
      %p46 = por %p44, %p45
      %p48 = scmp.ne.s32.totalorder %s31, %s47
      %p49 = scmp.eq.s32.totalorder %s23, 0
      %p50 = por %p48, %p49
      %s52 = sadd.s32 %s51, 1
      %p55 = scmp.eq.s32.totalorder %s17, 1
      %p56 = scmp.ne.s32.totalorder %s51, %s53
      %p57 = scmp.eq.s32.totalorder %s17, 0
      %p58 = por %p56, %p57
      %p59 = scmp.ne.s32.totalorder %s51, %s53
      %p60 = scmp.eq.s32.totalorder %s22, 1
      %p61 = por %p59, %p60
      %p62 = scmp.ne.s32.totalorder %s53, %s54
      %p63 = scmp.eq.s32.totalorder %s22, 0
      %p64 = por %p62, %p63
      %p65 = scmp.ne.s32.totalorder %s53, %s54
      %p66 = scmp.eq.s32.totalorder %s23, 1
      %p67 = por %p65, %p66
      %p69 = scmp.ne.s32.totalorder %s54, %s68
      %p70 = scmp.eq.s32.totalorder %s23, 0
      %p71 = por %p69, %p70
      %s73 = sadd.s32 %s72, 1
      %p76 = scmp.eq.s32.totalorder %s17, 1
      %p77 = scmp.ne.s32.totalorder %s72, %s74
      %p78 = scmp.eq.s32.totalorder %s17, 0
      %p79 = por %p77, %p78
      %p80 = scmp.ne.s32.totalorder %s72, %s74
      %p81 = scmp.eq.s32.totalorder %s22, 1
      %p82 = por %p80, %p81
      %p83 = scmp.ne.s32.totalorder %s74, %s75
      %p84 = scmp.eq.s32.totalorder %s22, 0
      %p85 = por %p83, %p84
      %p86 = scmp.ne.s32.totalorder %s74, %s75
      %p87 = scmp.eq.s32.totalorder %s23, 1
      %p88 = por %p86, %p87
      %p90 = scmp.ne.s32.totalorder %s75, %s89
      %p91 = scmp.eq.s32.totalorder %s23, 0
      %p92 = por %p90, %p91
      %s94 = sadd.s32 %s93, 1
      %p97 = scmp.eq.s32.totalorder %s17, 1
      %p98 = scmp.ne.s32.totalorder %s93, %s95
      %p99 = scmp.eq.s32.totalorder %s17, 0
      %p100 = por %p98, %p99
      %p101 = scmp.ne.s32.totalorder %s93, %s95
      %p102 = scmp.eq.s32.totalorder %s22, 1
      %p103 = por %p101, %p102
      %p104 = scmp.ne.s32.totalorder %s95, %s96
      %p105 = scmp.eq.s32.totalorder %s22, 0
      %p106 = por %p104, %p105
      %p107 = scmp.ne.s32.totalorder %s95, %s96
      %p108 = scmp.eq.s32.totalorder %s23, 1
      %p109 = por %p107, %p108
      %p111 = scmp.ne.s32.totalorder %s96, %s110
      %p112 = scmp.eq.s32.totalorder %s23, 0
      %p113 = por %p111, %p112
      %s115 = sadd.s32 %s114, 1
      %p118 = scmp.eq.s32.totalorder %s17, 1
      %p119 = scmp.ne.s32.totalorder %s114, %s116
      %p120 = scmp.eq.s32.totalorder %s17, 0
      %p121 = por %p119, %p120
      %p122 = scmp.ne.s32.totalorder %s114, %s116
      %p123 = scmp.eq.s32.totalorder %s22, 1
      %p124 = por %p122, %p123
      %p125 = scmp.ne.s32.totalorder %s116, %s117
      %p126 = scmp.eq.s32.totalorder %s22, 0
      %p127 = por %p125, %p126
      %p128 = scmp.ne.s32.totalorder %s116, %s117
      %p129 = scmp.eq.s32.totalorder %s23, 1
      %p130 = por %p128, %p129
      %p132 = scmp.ne.s32.totalorder %s117, %s131
      %p133 = scmp.eq.s32.totalorder %s23, 0
      %p134 = por %p132, %p133
      %s136 = sadd.s32 %s135, 1
      %p139 = scmp.eq.s32.totalorder %s17, 1
      %p140 = scmp.ne.s32.totalorder %s135, %s137
      %p141 = scmp.eq.s32.totalorder %s17, 0
      %p142 = por %p140, %p141
      %p143 = scmp.ne.s32.totalorder %s135, %s137
      %p144 = scmp.eq.s32.totalorder %s22, 1
      %p145 = por %p143, %p144
      %p146 = scmp.ne.s32.totalorder %s137, %s138
      %p147 = scmp.eq.s32.totalorder %s22, 0
      %p148 = por %p146, %p147
      %p149 = scmp.ne.s32.totalorder %s137, %s138
      %p150 = scmp.eq.s32.totalorder %s23, 1
      %p151 = por %p149, %p150
      %p153 = scmp.ne.s32.totalorder %s138, %s152
      %p154 = scmp.eq.s32.totalorder %s23, 0
      %p155 = por %p153, %p154
      %s157 = sadd.s32 %s156, 1
      %p160 = scmp.eq.s32.totalorder %s17, 1
      %p161 = scmp.ne.s32.totalorder %s156, %s158
      %p162 = scmp.eq.s32.totalorder %s17, 0
      %p163 = por %p161, %p162
      %p164 = scmp.ne.s32.totalorder %s156, %s158
      %p165 = scmp.eq.s32.totalorder %s22, 1
      %p166 = por %p164, %p165
      %p167 = scmp.ne.s32.totalorder %s158, %s159
      %p168 = scmp.eq.s32.totalorder %s22, 0
      %p169 = por %p167, %p168
      %p170 = scmp.ne.s32.totalorder %s158, %s159
      %p171 = scmp.eq.s32.totalorder %s23, 1
      %p172 = por %p170, %p171
      %p174 = scmp.ne.s32.totalorder %s159, %s173
      %p175 = scmp.eq.s32.totalorder %s23, 0
      %p176 = por %p174, %p175
      %s177 = ssub.s32 %s17, %s24
      %p178 = scmp.eq.s32.totalorder %s177, 0
      %s180 = sadd.s32 %s179, 1
      %s181 = scalar_select %p178, %s179, %s180
      %p184 = pneg %p178
      %p185 = scmp.eq.s32.totalorder %s17, 1
      %p186 = por %p184, %p185
      %p187 = scmp.ne.s32.totalorder %s179, %s182
      %p188 = scmp.eq.s32.totalorder %s17, 0
      %p189 = por %p187, %p188
      %p190 = scmp.ne.s32.totalorder %s179, %s182
      %p191 = scmp.eq.s32.totalorder %s22, 1
      %p192 = por %p190, %p191
      %p193 = scmp.ne.s32.totalorder %s182, %s183
      %p194 = scmp.eq.s32.totalorder %s22, 0
      %p195 = por %p193, %p194
      %p196 = scmp.ne.s32.totalorder %s182, %s183
      %p197 = scmp.eq.s32.totalorder %s23, 1
      %p198 = por %p196, %p197
      %p200 = scmp.ne.s32.totalorder %s183, %s199
      %p201 = scmp.eq.s32.totalorder %s23, 0
      %p202 = por %p200, %p201
      %p203 = scmp.le.s32.totalorder 1, %s17
      %p204 = scmp.lt.s32.totalorder %s17, 3
      %p205 = pnand %p203, %p204
      %p206 = pneg %p205
      // Predicated region
      $region9: #{tpu_custom_call.1} parent=5 // pred_check
        _
      $region10: #{tpu_custom_call.1} parent=5 // pred_check_branch
        %208 = sbr.rel (%p205) target = $region12
      $region11: #{tpu_custom_call.1} parent=5 // pred_region
        %s209 = ssub.s32 %s17, 1
        // Predicated region
        $region13: #{tpu_custom_call.1} parent=11 // pred_check
          %p210 = pneg %p64
        $region14: #{tpu_custom_call.1} parent=11 // pred_check_branch
          %212 = sbr.rel (%p210) target = $region16
        $region15: #{tpu_custom_call.1} parent=11 // pred_region
          _
        $region16: #{tpu_custom_call.1} parent=11 // pred_fallthru
          _
        // Predicated region
        $region17: #{tpu_custom_call.1} parent=11 // pred_check
          %p213 = pneg %p85
        $region18: #{tpu_custom_call.1} parent=11 // pred_check_branch
          %215 = sbr.rel (%p213) target = $region20
        $region19: #{tpu_custom_call.1} parent=11 // pred_region
          _
        $region20: #{tpu_custom_call.1} parent=11 // pred_fallthru
          _
        // Predicated region
        $region21: #{tpu_custom_call.1} parent=11 // pred_check
          %p216 = pneg %p106
        $region22: #{tpu_custom_call.1} parent=11 // pred_check_branch
          %218 = sbr.rel (%p216) target = $region24
        $region23: #{tpu_custom_call.1} parent=11 // pred_region
          _
        $region24: #{tpu_custom_call.1} parent=11 // pred_fallthru
          _
        // Predicated region
        $region25: #{tpu_custom_call.1} parent=11 // pred_check
          %p219 = pneg %p127
        $region26: #{tpu_custom_call.1} parent=11 // pred_check_branch
          %221 = sbr.rel (%p219) target = $region28
        $region27: #{tpu_custom_call.1} parent=11 // pred_region
          _
        $region28: #{tpu_custom_call.1} parent=11 // pred_fallthru
          _
        // Predicated region
        $region29: #{tpu_custom_call.1} parent=11 // pred_check
          %p222 = pneg %p148
        $region30: #{tpu_custom_call.1} parent=11 // pred_check_branch
          %224 = sbr.rel (%p222) target = $region32
        $region31: #{tpu_custom_call.1} parent=11 // pred_region
          _
        $region32: #{tpu_custom_call.1} parent=11 // pred_fallthru
          _
        // Predicated region
        $region33: #{tpu_custom_call.1} parent=11 // pred_check
          %p225 = pneg %p169
        $region34: #{tpu_custom_call.1} parent=11 // pred_check_branch
          %227 = sbr.rel (%p225) target = $region36
        $region35: #{tpu_custom_call.1} parent=11 // pred_region
          _
        $region36: #{tpu_custom_call.1} parent=11 // pred_fallthru
          _
      $region12: #{tpu_custom_call.1} parent=5 // pred_fallthru
        _
      %p228 = scmp.lt.s32.totalorder %s17, 2
      // Predicated region
      $region37: #{tpu_custom_call.1} parent=5 // pred_check
        %p229 = pneg %p228
      $region38: #{tpu_custom_call.1} parent=5 // pred_check_branch
        %231 = sbr.rel (%p229) target = $region40
      $region39: #{tpu_custom_call.1} parent=5 // pred_region
        // Predicated region
        $region41: #{tpu_custom_call.1} parent=39 // pred_check
          %p232 = pneg %p37
        $region42: #{tpu_custom_call.1} parent=39 // pred_check_branch
          %234 = sbr.rel (%p232) target = $region44
        $region43: #{tpu_custom_call.1} parent=39 // pred_region
          %s235 = sand.u32 %s27, 1
          %s236 = sand.u32 %s27, 1
          %s237 = smul.addr %s236, 32
          %s238 = scalar_lea.vmem [#allocation3], %s237
          %s239 = smul.u32 2, %s17
          %s240 = smul.addr %s239, 4
          %s241 = scalar_lea.vmem %s0, %s240
          // Predicated region
          $region45: #{tpu_custom_call.1} parent=43 // pred_check
            _
          $region46: #{tpu_custom_call.1} parent=43 // pred_check_branch
            %243 = sbr.rel (0) target = $region48
          $region47: #{tpu_custom_call.1} parent=43 // pred_region
            // Predicated region
            $region49: #{tpu_custom_call.1} parent=47 // pred_check
              _
            $region50: #{tpu_custom_call.1} parent=47 // pred_check_branch
              %245 = sbr.rel (0) target = $region52
            $region51: #{tpu_custom_call.1} parent=47 // pred_region
              // Predicated region
              $region64: #{tpu_custom_call.1} parent=51 // pred_check
                _
              $region65: #{tpu_custom_call.1} parent=51 // pred_check_branch
                %266 = sbr.rel (0) target = $region67
              $region66: #{tpu_custom_call.1} parent=51 // pred_region
                loop: start=0, step=1, limit=1
                $region68: #{tpu_custom_call.1} parent=66 // loop_pre_header
                  _
                $region69: #{tpu_custom_call.1} parent=66 // loop_header
                  %s268 = sphi 0, %s272
                  %p269 = scmp.ge.s32.totalorder %s268, 1
                  %s273 = sphi %s241, %s241
                  %s274 = sphi %s238, %s238
                $region70: #{tpu_custom_call.1} parent=66 // loop_header_branch
                  %271 = sbr.rel (%p269) target = $region74
                $region71: #{tpu_custom_call.1} parent=66 // loop_body
                  %v275 = vld [vmem:[%s273] sm:$0xff]
                  %276 = vst [vmem:[%s274] sm:$0xff] %v275
                  %v277 = vld [vmem:[%s273 + $0x10] sm:$0xff]
                  %278 = vst [vmem:[%s274 + $0x8] sm:$0xff] %v277
                  %v279 = vld [vmem:[%s273 + $0x20] sm:$0xff]
                  %280 = vst [vmem:[%s274 + $0x10] sm:$0xff] %v279
                  %v281 = vld [vmem:[%s273 + $0x30] sm:$0xff]
                  %282 = vst [vmem:[%s274 + $0x18] sm:$0xff] %v281
                $region72: #{tpu_custom_call.1} parent=66 // loop_footer
                  %s272 = sadd.s32 1, %s268
                $region73: #{tpu_custom_call.1} parent=66 // loop_footer_branch
                  %267 = sbr.rel target = $region69
                $region74: #{tpu_custom_call.1} parent=66 // loop_exit
                  _
              $region67: #{tpu_custom_call.1} parent=51 // pred_fallthru
                _
              // Predicated region
              $region75: #{tpu_custom_call.1} parent=51 // pred_check
                _
              $region76: #{tpu_custom_call.1} parent=51 // pred_check_branch
                %284 = sbr.rel target = $region78
              $region77: #{tpu_custom_call.1} parent=51 // pred_region
                _
              $region78: #{tpu_custom_call.1} parent=51 // pred_fallthru
                _
            $region52: #{tpu_custom_call.1} parent=47 // pred_fallthru
              _
            // Predicated region
            $region53: #{tpu_custom_call.1} parent=47 // pred_check
              _
            $region54: #{tpu_custom_call.1} parent=47 // pred_check_branch
              %247 = sbr.rel target = $region56
            $region55: #{tpu_custom_call.1} parent=47 // pred_region
              loop: start=0, step=1, limit=1
              $region57: #{tpu_custom_call.1} parent=55 // loop_pre_header
                _
              $region58: #{tpu_custom_call.1} parent=55 // loop_header
                %s250 = sphi 0, %s254
                %p251 = scmp.ge.s32.totalorder %s250, 1
                %s255 = sphi %s241, %s241
                %s256 = sphi %s238, %s238
              $region59: #{tpu_custom_call.1} parent=55 // loop_header_branch
                %253 = sbr.rel (%p251) target = $region63
              $region60: #{tpu_custom_call.1} parent=55 // loop_body
                %v257 = vld [vmem:[%s255] sm:$0xff]
                %258 = vst [vmem:[%s256] sm:$0xff] %v257
                %v259 = vld [vmem:[%s255 + $0x10] sm:$0xff]
                %260 = vst [vmem:[%s256 + $0x8] sm:$0xff] %v259
                %v261 = vld [vmem:[%s255 + $0x20] sm:$0xff]
                %262 = vst [vmem:[%s256 + $0x10] sm:$0xff] %v261
                %v263 = vld [vmem:[%s255 + $0x30] sm:$0xff]
                %264 = vst [vmem:[%s256 + $0x18] sm:$0xff] %v263
              $region61: #{tpu_custom_call.1} parent=55 // loop_footer
                %s254 = sadd.s32 1, %s250
              $region62: #{tpu_custom_call.1} parent=55 // loop_footer_branch
                %249 = sbr.rel target = $region58
              $region63: #{tpu_custom_call.1} parent=55 // loop_exit
                _
            $region56: #{tpu_custom_call.1} parent=47 // pred_fallthru
              _
          $region48: #{tpu_custom_call.1} parent=43 // pred_fallthru
            _
          %285 = vnop
        $region44: #{tpu_custom_call.1} parent=39 // pred_fallthru
          _
      $region40: #{tpu_custom_call.1} parent=5 // pred_fallthru
        _
      %p286 = scmp.le.s32.totalorder 1, %s17
      %p287 = scmp.lt.s32.totalorder %s17, 3
      %p288 = pnand %p286, %p287
      %p289 = pneg %p288
      // Predicated region
      $region79: #{tpu_custom_call.1} parent=5 // pred_check
        _
      $region80: #{tpu_custom_call.1} parent=5 // pred_check_branch
        %291 = sbr.rel (%p288) target = $region82
      $region81: #{tpu_custom_call.1} parent=5 // pred_region
        %s292 = ssub.s32 %s17, 1
        %s293 = sand.u32 %s30, 1
        %s294 = sand.u32 %s30, 1
        %s295 = smul.addr %s294, 32
        %s296 = scalar_lea.vmem [#allocation3], %s295
        // Predicated region
        $region83: #{tpu_custom_call.1} parent=81 // pred_check
          %p297 = pneg %p43
        $region84: #{tpu_custom_call.1} parent=81 // pred_check_branch
          %299 = sbr.rel (%p297) target = $region86
        $region85: #{tpu_custom_call.1} parent=81 // pred_region
          _
        $region86: #{tpu_custom_call.1} parent=81 // pred_fallthru
          _
        %s300 = sand.u32 %s30, 1
        %s301 = sand.u32 %s30, 1
        %s302 = smul.addr %s301, 32
        %s303 = scalar_lea.vmem [#allocation3], %s302
        %p304 = pneg %p43
        %p305 = pneg %p40
        %p306 = pneg %p64
        %p307 = pneg %p61
        %p308 = pneg %p85
        %p309 = pneg %p82
        %p310 = pneg %p106
        %p311 = pneg %p103
        %p312 = pneg %p127
        %p313 = pneg %p124
        %p314 = pneg %p148
        %p315 = pneg %p145
        %p316 = pneg %p169
        %p317 = pneg %p166
        %p318 = pneg %p195
        %p319 = pneg %p192
        %s320 = sand.u32 %s182, 1
        %s321 = scalar_lea.sflag [#allocation5], %s320
        %s322 = sand.u32 %s182, 1
        %s323 = smul.addr %s322, 2
        %s324 = scalar_lea.vmem [#allocation4], %s323
        %s325 = smul.u32 2, %s22
        %s326 = smul.u32 2, %s22
        %v328 = vld [vmem:[%s296] sm:$0xff]
        %v329 = vld [vmem:[%s296 + $0x8] sm:$0xff]
        %v330 = vld [vmem:[%s296 + $0x10] sm:$0xff]
        %v331 = vld [vmem:[%s296 + $0x18] sm:$0xff]
        %v332 = vld [vmem:[%s1] sm:$0xf]
        %v333 = vld [vmem:[%s1 + $0x4] sm:$0xf]
        %v334 = vld [vmem:[%s1 + $0x8] sm:$0xf]
        %v335 = vld [vmem:[%s1 + $0xc] sm:$0xf]
        %v336 = vld [vmem:[%s1 + $0x10] sm:$0xf]
        %v337 = vld [vmem:[%s1 + $0x14] sm:$0xf]
        %v338 = vld [vmem:[%s1 + $0x18] sm:$0xf]
        %v339 = vld [vmem:[%s1 + $0x1c] sm:$0xf]
        %v340 = vld [vmem:[%s2] sm:$0xff]
        %v341 = vld [vmem:[%s2 + $0x8] sm:$0xff]
        %v342 = vld [vmem:[%s2 + $0x10] sm:$0xff]
        %v343 = vld [vmem:[%s2 + $0x18] sm:$0xff]
        %v344 = vld [vmem:[%s2 + $0x20] sm:$0xff]
        %v345 = vld [vmem:[%s2 + $0x28] sm:$0xff]
        %v346 = vld [vmem:[%s2 + $0x30] sm:$0xff]
        %v347 = vld [vmem:[%s2 + $0x38] sm:$0xff]
        %349 = vset.pattern.permute.xlu0 0
        %350 = vperm.xlu0 %349, %v340
        %v351 = vpop.permute.xlu0 %350
        %354 = vset.pattern.permute.xlu0 0
        %355 = vperm.xlu0 %354, %v341
        %v356 = vpop.permute.xlu0 %355
        %359 = vset.pattern.permute.xlu0 0
        %360 = vperm.xlu0 %359, %v342
        %v361 = vpop.permute.xlu0 %360
        %364 = vset.pattern.permute.xlu0 0
        %365 = vperm.xlu0 %364, %v343
        %v366 = vpop.permute.xlu0 %365
        %369 = vset.pattern.permute.xlu0 0
        %370 = vperm.xlu0 %369, %v344
        %v371 = vpop.permute.xlu0 %370
        %374 = vset.pattern.permute.xlu0 0
        %375 = vperm.xlu0 %374, %v345
        %v376 = vpop.permute.xlu0 %375
        %379 = vset.pattern.permute.xlu0 0
        %380 = vperm.xlu0 %379, %v346
        %v381 = vpop.permute.xlu0 %380
        %384 = vset.pattern.permute.xlu0 0
        %385 = vperm.xlu0 %384, %v347
        %v386 = vpop.permute.xlu0 %385
        %v396 = vunpack.c.l.b16 %v332
        %v397 = vunpack.c.l.b16 %v333
        %v398 = vunpack.c.l.b16 %v334
        %v399 = vunpack.c.l.b16 %v335
        %v400 = vunpack.c.l.b16 %v336
        %v401 = vunpack.c.l.b16 %v337
        %v402 = vunpack.c.l.b16 %v338
        %v403 = vunpack.c.l.b16 %v339
        %v404 = vpack.c.b16 %v397, %v396
        %v405 = vpack.c.b16 %v399, %v398
        %v406 = vpack.c.b16 %v401, %v400
        %v407 = vpack.c.b16 %v403, %v402
        %v412 = vunpack.c.l.b16 %v328
        %v413 = vunpack.c.h.b16 %v328
        %v414 = vunpack.c.l.b16 %v329
        %v415 = vunpack.c.h.b16 %v329
        %v416 = vunpack.c.l.b16 %v330
        %v417 = vunpack.c.h.b16 %v330
        %v418 = vunpack.c.l.b16 %v331
        %v419 = vunpack.c.h.b16 %v331
        %v420 = vpack.c.b16 %v414, %v412
        %v421 = vpack.c.b16 %v415, %v413
        %v422 = vpack.c.b16 %v418, %v416
        %v423 = vpack.c.b16 %v419, %v417
        %vm428 = vcmask 261120
        %v430 = vsel %vm428, %v404, 0
        %v433 = vsel %vm428, %v405, 0
        %v436 = vsel %vm428, %v406, 0
        %v439 = vsel %vm428, %v407, 0
        %441 = vmatprep.subr.bf16.mxu0 %v421
        %442 = vmatpush1.bf16.msra.mxu0 %v420
        %443 = vmatprep.subr.bf16.mxu0 %v423
        %444 = vmatpush1.bf16.msra.mxu0 %v422
        %445 = vmatprep.subr.bf16.mxu0 0
        %446 = vmatpush1.bf16.msra.mxu0 0
        %447 = vmatprep.subr.bf16.mxu0 0
        %448 = vmatpush1.bf16.msra.mxu0 0
        %449 = vmatprep.subr.bf16.mxu0 0
        %450 = vmatpush1.bf16.msra.mxu0 0
        %451 = vmatprep.subr.bf16.mxu0 0
        %452 = vmatpush1.bf16.msra.mxu0 0
        %453 = vmatprep.subr.bf16.mxu0 0
        %454 = vmatpush1.bf16.msra.mxu0 0
        %455 = vmatprep.subr.bf16.mxu0 0
        %456 = vmatpush1.bf16.msra.mxu0 0
        %457 = vmatprep.subr.bf16.mxu0 0
        %458 = vmatpush1.bf16.msra.mxu0 0
        %459 = vmatprep.subr.bf16.mxu0 0
        %460 = vmatpush1.bf16.msra.mxu0 0
        %461 = vmatprep.subr.bf16.mxu0 0
        %462 = vmatpush1.bf16.msra.mxu0 0
        %463 = vmatprep.subr.bf16.mxu0 0
        %464 = vmatpush1.bf16.msra.mxu0 0
        %465 = vmatprep.subr.bf16.mxu0 0
        %466 = vmatpush1.bf16.msra.mxu0 0
        %467 = vmatprep.subr.bf16.mxu0 0
        %468 = vmatpush1.bf16.msra.mxu0 0
        %469 = vmatprep.subr.bf16.mxu0 0
        %470 = vmatpush1.bf16.msra.mxu0 0
        %471 = vmatprep.subr.bf16.mxu0 0
        %472 = vmatpush1.bf16.msra.mxu0 0
        %473 = vmatprep.mubr.bf16.mxu0 0
        %474 = vmatmul.mubr.bf16.gmra.mrb[0].mxu0 %v430
        %v475 = vpop.f32.mrb[0].mxu0
        %v476 = vadd.f32 %v351, %v475
        %v477 = vpop.f32.mrb[0].mxu0
        %v478 = vadd.f32 %v351, %v477
        %v479 = vpop.f32.mrb[0].mxu0
        %v480 = vadd.f32 %v356, %v479
        %v481 = vpop.f32.mrb[0].mxu0
        %v482 = vadd.f32 %v356, %v481
        %483 = vmatprep.mubr.bf16.mxu0 0
        %484 = vmatmul.mubr.bf16.gmra.mrb[0].mxu0 %v433
        %v485 = vpop.f32.mrb[0].mxu0
        %v486 = vadd.f32 %v361, %v485
        %v487 = vpop.f32.mrb[0].mxu0
        %v488 = vadd.f32 %v361, %v487
        %v489 = vpop.f32.mrb[0].mxu0
        %v490 = vadd.f32 %v366, %v489
        %v491 = vpop.f32.mrb[0].mxu0
        %v492 = vadd.f32 %v366, %v491
        %493 = vmatprep.mubr.bf16.mxu0 0
        %494 = vmatmul.mubr.bf16.gmra.mrb[0].mxu0 %v436
        %v495 = vpop.f32.mrb[0].mxu0
        %v496 = vadd.f32 %v371, %v495
        %v497 = vpop.f32.mrb[0].mxu0
        %v498 = vadd.f32 %v371, %v497
        %v499 = vpop.f32.mrb[0].mxu0
        %v500 = vadd.f32 %v376, %v499
        %v501 = vpop.f32.mrb[0].mxu0
        %v502 = vadd.f32 %v376, %v501
        %503 = vmatprep.mubr.bf16.mxu0 0
        %504 = vmatmul.mubr.bf16.gmra.mrb[0].mxu0 %v439
        %v505 = vpop.f32.mrb[0].mxu0
        %v506 = vadd.f32 %v381, %v505
        %v507 = vpop.f32.mrb[0].mxu0
        %v508 = vadd.f32 %v381, %v507
        %v509 = vpop.f32.mrb[0].mxu0
        %v510 = vadd.f32 %v386, %v509
        %v511 = vpop.f32.mrb[0].mxu0
        %v512 = vadd.f32 %v386, %v511
        %513 = vdwg.mxu0
        %v514 = vmax.f32 %v476, 0.0
        %v515 = vmax.f32 %v478, 0.0
        %v516 = vmax.f32 %v480, 0.0
        %v517 = vmax.f32 %v482, 0.0
        %v518 = vmax.f32 %v486, 0.0
        %v519 = vmax.f32 %v488, 0.0
        %v520 = vmax.f32 %v490, 0.0
        %v521 = vmax.f32 %v492, 0.0
        %v522 = vmax.f32 %v496, 0.0
        %v523 = vmax.f32 %v498, 0.0
        %v524 = vmax.f32 %v500, 0.0
        %v525 = vmax.f32 %v502, 0.0
        %v526 = vmax.f32 %v506, 0.0
        %v527 = vmax.f32 %v508, 0.0
        %v528 = vmax.f32 %v510, 0.0
        %v529 = vmax.f32 %v512, 0.0
        %v530 = vld [vmem:[%s3] sm:$0xf]
        %v531 = vld [vmem:[%s3 + $0x4] sm:$0xf]
        %v532 = vld [vmem:[%s3 + $0x8] sm:$0xf]
        %v533 = vld [vmem:[%s3 + $0xc] sm:$0xf]
        %v534 = vpack.c.bf16 %v516, %v514
        %v535 = vpack.c.bf16 %v517, %v515
        %v536 = vpack.c.bf16 %v520, %v518
        %v537 = vpack.c.bf16 %v521, %v519
        %v538 = vpack.c.bf16 %v524, %v522
        %v539 = vpack.c.bf16 %v525, %v523
        %v540 = vpack.c.bf16 %v528, %v526
        %v541 = vpack.c.bf16 %v529, %v527
        %v542 = vld [vmem:[%s4] sm:$0xff]
        %v543 = vld [vmem:[%s4 + $0x8] sm:$0xff]
        %v544 = vld [vmem:[%s4 + $0x10] sm:$0xff]
        %v545 = vld [vmem:[%s4 + $0x18] sm:$0xff]
        %547 = vset.pattern.permute.xlu0 0
        %548 = vperm.xlu0 %547, %v542
        %v549 = vpop.permute.xlu0 %548
        %552 = vset.pattern.permute.xlu0 0
        %553 = vperm.xlu0 %552, %v543
        %v554 = vpop.permute.xlu0 %553
        %557 = vset.pattern.permute.xlu0 0
        %558 = vperm.xlu0 %557, %v544
        %v559 = vpop.permute.xlu0 %558
        %562 = vset.pattern.permute.xlu0 0
        %563 = vperm.xlu0 %562, %v545
        %v564 = vpop.permute.xlu0 %563
        %v570 = vunpack.c.l.b16 %v530
        %v571 = vunpack.c.l.b16 %v531
        %v572 = vunpack.c.l.b16 %v532
        %v573 = vunpack.c.l.b16 %v533
        %v574 = vpack.c.b16 %v571, %v570
        %v575 = vpack.c.b16 %v573, %v572
        %vm576 = vcmask 523264
        %v578 = vsel %vm576, %v574, 0
        %v581 = vsel %vm576, %v575, 0
        %583 = vmatprep.subr.bf16.mxu0 %v535
        %584 = vmatpush1.bf16.msra.mxu0 %v534
        %585 = vmatprep.subr.bf16.mxu0 %v537
        %586 = vmatpush1.bf16.msra.mxu0 %v536
        %587 = vmatprep.subr.bf16.mxu0 %v539
        %588 = vmatpush1.bf16.msra.mxu0 %v538
        %589 = vmatprep.subr.bf16.mxu0 %v541
        %590 = vmatpush1.bf16.msra.mxu0 %v540
        %591 = vmatprep.subr.bf16.mxu0 0
        %592 = vmatpush1.bf16.msra.mxu0 0
        %593 = vmatprep.subr.bf16.mxu0 0
        %594 = vmatpush1.bf16.msra.mxu0 0
        %595 = vmatprep.subr.bf16.mxu0 0
        %596 = vmatpush1.bf16.msra.mxu0 0
        %597 = vmatprep.subr.bf16.mxu0 0
        %598 = vmatpush1.bf16.msra.mxu0 0
        %599 = vmatprep.subr.bf16.mxu0 0
        %600 = vmatpush1.bf16.msra.mxu0 0
        %601 = vmatprep.subr.bf16.mxu0 0
        %602 = vmatpush1.bf16.msra.mxu0 0
        %603 = vmatprep.subr.bf16.mxu0 0
        %604 = vmatpush1.bf16.msra.mxu0 0
        %605 = vmatprep.subr.bf16.mxu0 0
        %606 = vmatpush1.bf16.msra.mxu0 0
        %607 = vmatprep.subr.bf16.mxu0 0
        %608 = vmatpush1.bf16.msra.mxu0 0
        %609 = vmatprep.subr.bf16.mxu0 0
        %610 = vmatpush1.bf16.msra.mxu0 0
        %611 = vmatprep.subr.bf16.mxu0 0
        %612 = vmatpush1.bf16.msra.mxu0 0
        %613 = vmatprep.subr.bf16.mxu0 0
        %614 = vmatpush1.bf16.msra.mxu0 0
        %615 = vmatprep.mubr.bf16.mxu0 0
        %616 = vmatmul.mubr.bf16.gmra.mrb[0].mxu0 %v578
        %v617 = vpop.f32.mrb[0].mxu0
        %v618 = vadd.f32 %v549, %v617
        %v619 = vpop.f32.mrb[0].mxu0
        %v620 = vadd.f32 %v549, %v619
        %v621 = vpop.f32.mrb[0].mxu0
        %v622 = vadd.f32 %v554, %v621
        %v623 = vpop.f32.mrb[0].mxu0
        %v624 = vadd.f32 %v554, %v623
        %625 = vmatprep.mubr.bf16.mxu0 0
        %626 = vmatmul.mubr.bf16.gmra.mrb[0].mxu0 %v581
        %v627 = vpop.f32.mrb[0].mxu0
        %v628 = vadd.f32 %v559, %v627
        %v629 = vpop.f32.mrb[0].mxu0
        %v630 = vadd.f32 %v559, %v629
        %v631 = vpop.f32.mrb[0].mxu0
        %v632 = vadd.f32 %v564, %v631
        %v633 = vpop.f32.mrb[0].mxu0
        %v634 = vadd.f32 %v564, %v633
        %635 = vdwg.mxu0
        %v636 = vmax.f32 %v618, 0.0
        %v637 = vmax.f32 %v620, 0.0
        %v638 = vmax.f32 %v622, 0.0
        %v639 = vmax.f32 %v624, 0.0
        %v640 = vmax.f32 %v628, 0.0
        %v641 = vmax.f32 %v630, 0.0
        %v642 = vmax.f32 %v632, 0.0
        %v643 = vmax.f32 %v634, 0.0
        %v644 = vld [vmem:[%s5] sm:$0xff]
        %v645 = vld [vmem:[%s5 + $0x8] sm:$0xff]
        %v646 = vld [vmem:[%s5 + $0x10] sm:$0xff]
        %v647 = vld [vmem:[%s5 + $0x18] sm:$0xff]
        %649 = vset.pattern.permute.xlu0 0
        %650 = vperm.xlu0 %649, %v644
        %v651 = vpop.permute.xlu0 %650
        %654 = vset.pattern.permute.xlu0 0
        %655 = vperm.xlu0 %654, %v645
        %v656 = vpop.permute.xlu0 %655
        %659 = vset.pattern.permute.xlu0 0
        %660 = vperm.xlu0 %659, %v646
        %v661 = vpop.permute.xlu0 %660
        %664 = vset.pattern.permute.xlu0 0
        %665 = vperm.xlu0 %664, %v647
        %v666 = vpop.permute.xlu0 %665
        %v668 = vmul.f32 %v636, %v651
        %v669 = vmul.f32 %v637, %v651
        %v670 = vmul.f32 %v638, %v656
        %v671 = vmul.f32 %v639, %v656
        %v672 = vmul.f32 %v640, %v661
        %v673 = vmul.f32 %v641, %v661
        %v674 = vmul.f32 %v642, %v666
        %v675 = vmul.f32 %v643, %v666
        %v676 = vadd.f32 %v668, %v670
        %v677 = vadd.f32 %v676, %v672
        %v678 = vadd.f32 %v677, %v674
        %v679 = vrot.slane %v678, 4
        %v680 = vadd.f32 %v678, %v679
        %v681 = vrot.slane %v680, 2
        %v682 = vadd.f32 %v680, %v681
        %v683 = vrot.slane %v682, 1
        %v684 = vadd.f32 %v682, %v683
        %v685 = vadd.f32 %v669, %v671
        %v686 = vadd.f32 %v685, %v673
        %v687 = vadd.f32 %v686, %v675
        %v688 = vrot.slane %v687, 4
        %v689 = vadd.f32 %v687, %v688
        %v690 = vrot.slane %v689, 2
        %v691 = vadd.f32 %v689, %v690
        %v692 = vrot.slane %v691, 1
        %v693 = vadd.f32 %v691, %v692
        %s694 = sld [smem:[#allocation2]]
        %v695 = vstv %s694
        %v696 = vadd.f32 %v684, %v695
        %v697 = vadd.f32 %v693, %v695
        %v698 = vxor.u32 %v696, 2147483648
        %v699 = vxor.u32 %v697, 2147483648
        %v700 = vmul.f32 %v698, 1.442695
        %v701 = vpow.pop %v700
        %v702 = vmul.f32 %v699, 1.442695
        %v703 = vpow.pop %v702
        %v704 = vadd.f32 %v701, 1.0
        %v705 = vadd.f32 %v703, 1.0
        %v706 = vrcp.pop %v704
        %v707 = vmul.f32 1.0, %v706
        %v708 = vrcp.pop %v705
        %v709 = vmul.f32 1.0, %v708
        %v712 = vcombine.low %v707, %v709
        %v714 = vunpack.c.l.s4 1966171168
        %v715 = vunpack.c.0.s8 %v714
        %v716 = vlaneseq
        %v717 = vshrl.u32 %v716, 7
        %v718 = vsub.s32 %v715, %v717
        %v719 = vrot.slane %v712, %v718
        %v721 = vunpack.c.l.s4 1966171168
        %v722 = vunpack.c.0.s8 %v721
        %v723 = vlaneseq
        %v724 = vshrl.u32 %v723, 7
        %v725 = vsub.s32 %v722, %v724
        %v726 = vrot.slane %v719, %v725
        %v728 = vlaneseq
        %vm729 = vcmp.ge.s32.totalorder %v728, 0
        %vm730 = vcmp.lt.s32.totalorder %v728, 256
        %vm731 = vmand %vm729, %vm730
        %732 = vst.msk [vmem:[%s324] sm:$0x3] %vm731, %v726
        %s733 = sand.u32 %s182, 1
        %s734 = scalar_lea.sflag [#allocation5], %s733
        %s735 = sand.u32 %s182, 1
        %s736 = smul.addr %s735, 2
        %s737 = scalar_lea.vmem [#allocation4], %s736
        // Predicated region
        $region87: #{tpu_custom_call.1} parent=81 // pred_check
          %p738 = pneg %p192
        $region88: #{tpu_custom_call.1} parent=81 // pred_check_branch
          %740 = sbr.rel (%p738) target = $region90
        $region89: #{tpu_custom_call.1} parent=81 // pred_region
          %s741 = smul.u32 2, %s22
          %s743 = ssub.s32 32, 32
          %744 = vsyncadd %s734, %s743
          %s745 = smul.addr %s741, 16
          %s746 = scalar_lea.hbm %s7, %s745
          %s748 = sshll.u32 %s737, 4
          %s749 = int_to_ptr.vmem [resolvable:$true] %s748
          %751 = dma.vmem_to_hbm [thread:$0]  %s749, 32, %s746, %s734
        $region90: #{tpu_custom_call.1} parent=81 // pred_fallthru
          _
      $region82: #{tpu_custom_call.1} parent=5 // pred_fallthru
        _
      %p752 = scmp.le.s32.totalorder 2, %s17
      // Predicated region
      $region91: #{tpu_custom_call.1} parent=5 // pred_check
        %p753 = pneg %p752
      $region92: #{tpu_custom_call.1} parent=5 // pred_check_branch
        %755 = sbr.rel (%p753) target = $region94
      $region93: #{tpu_custom_call.1} parent=5 // pred_region
        %s756 = ssub.s32 %s17, 2
        // Predicated region
        $region95: #{tpu_custom_call.1} parent=93 // pred_check
          %p757 = pneg %p198
        $region96: #{tpu_custom_call.1} parent=93 // pred_check_branch
          %759 = sbr.rel (%p757) target = $region98
        $region97: #{tpu_custom_call.1} parent=93 // pred_region
          %s760 = sand.u32 %s183, 1
          %s761 = scalar_lea.sflag [#allocation5], %s760
          %s762 = sand.u32 %s183, 1
          %s763 = smul.addr %s762, 2
          %s764 = scalar_lea.vmem [#allocation4], %s763
          %765 = dma.done %s761, 32
        $region98: #{tpu_custom_call.1} parent=93 // pred_fallthru
          _
      $region94: #{tpu_custom_call.1} parent=5 // pred_fallthru
        _
    $region6: #{tpu_custom_call.1} parent=1 // loop_footer
      %s21 = sadd.s32 1, %s17
    $region7: #{tpu_custom_call.1} parent=1 // loop_footer_branch
      %16 = sbr.rel target = $region3
    $region8: #{tpu_custom_call.1} parent=1 // loop_exit
      _
    %766 = vsyncpa [#allocation5], 1
    %s767 = scalar_lea.sflag [#allocation5], 1
    %768 = vsyncpa %s767, 1

</llo_original>
